<compile_context>
chip_gen: v7x
topology: tpu7x:2x2x1
jax: 0.10.0
libtpu: 0.0.40
codegen_flags: <defaults>
</compile_context>

<pallas_src>
import jax
import jax.numpy as jnp
from jax.experimental import pallas as pl
from jax.experimental.pallas import tpu as pltpu

LN_EPS = 1e-5


def _head_kernel(x_ref, gw_ref, bw_ref, o_ref):
    # x_ref: (TB, S, H) Q-Former hidden states (bf16 or f32).
    # Mean over query tokens (sublane axis), accumulated in f32.
    pooled = jnp.mean(x_ref[...], axis=1, dtype=jnp.float32)      # (TB, H)

    # LayerNorm statistics over the hidden (lane) dim.
    mu = jnp.mean(pooled, axis=-1, keepdims=True)                 # (TB, 1)
    xc = pooled - mu
    var = jnp.mean(xc * xc, axis=-1, keepdims=True)               # (TB, 1)
    inv = jax.lax.rsqrt(var + LN_EPS)                             # (TB, 1)

    # Fused LayerNorm-affine + Linear(H, 1):
    #   y = inv * sum((pooled - mu) * (gamma * w)) + (beta . w + b)
    # VPU multiply + XLU lane reduce; no MXU involved.
    proj = jnp.sum(xc * gw_ref[...], axis=-1, keepdims=True)      # (TB, 1)
    y = inv * proj + bw_ref[0, 0]

    o_ref[...] = y.astype(o_ref.dtype)


def _vmem_capacity_bytes():
    try:
        return int(pltpu.get_tpu_info().vmem_capacity_bytes)
    except Exception:
        return 128 << 20  # v5e/v6e capacity; conservative fallback


def _round_up(x, m):
    return (x + m - 1) // m * m


def _pick_batch_tile(B, S, H, itemsize, vmem_cap, block_b=None):
    """Batch-tile size TB: multiple of 8 (or == B), sized to this chip's VMEM."""
    row_bytes = max(S * H * itemsize, 1)
    # One input block at ~VMEM/4 (it is double-buffered), capped at 32 MiB so
    # per-step DMA time dwarfs the ~0.35 us per-grid-step overhead.
    block_budget = min(vmem_cap // 4, 32 << 20)
    tb = max(8, (block_budget // row_bytes) // 8 * 8)
    if block_b is not None:
        tb = min(tb, block_b)
    if tb >= B:
        tb = B
        # Split one full tile in two so the "parallel" batch axis can shard
        # across v7x's two TensorCores (needs multiple-of-8 tiles).
        if block_b is None and B >= 16:
            tb = _round_up((B + 1) // 2, 8)
    if tb != B:
        # Output block (TB, 1): second-to-last dim must be a multiple of 8
        # (or equal the full batch dim).
        tb = max(8, (tb // 8) * 8)
        if tb >= B:
            tb = B
    return tb


def blip2_regressor_head(q_last, gamma, beta, w, b, *, block_b=None):
    """q_last: (B, S, H) Q-Former last hidden states; returns (B,) scores."""
    B, S, H = q_last.shape
    itemsize = q_last.dtype.itemsize

    # --- fold LayerNorm affine into the projection (wrapper-side, tiny) ---
    gamma_f = gamma.reshape(-1).astype(jnp.float32)
    beta_f = beta.reshape(-1).astype(jnp.float32)
    w_f = w.reshape(-1).astype(jnp.float32)
    gw = (gamma_f * w_f).reshape(1, H)                                  # (1, H)
    bw = (jnp.dot(beta_f, w_f) + b.reshape(())).astype(jnp.float32).reshape(1, 1)

    # --- chip-aware batch tiling; ragged grid, no jnp.pad ---
    vmem_cap = _vmem_capacity_bytes()
    TB = _pick_batch_tile(B, S, H, itemsize, vmem_cap, block_b)
    num_tiles = pl.cdiv(B, TB)

    # Explicit VMEM budget: double-buffered input block + gw/output/scratch
    # slack, capped to 75% of this chip's physical VMEM (v7x has only 64 MiB).
    block_bytes = TB * S * H * itemsize
    vmem_limit = int(min(max(2 * block_bytes + (4 << 20), 16 << 20),
                         (vmem_cap * 3) // 4))

    cost = pl.CostEstimate(
        flops=int(B * S * H + 8 * B * H),
        transcendentals=int(B),
        bytes_accessed=int(B * S * H * itemsize + H * 4 + B * 4),
    )

    out = pl.pallas_call(
        _head_kernel,
        out_shape=jax.ShapeDtypeStruct((B, 1), jnp.float32),
        grid=(num_tiles,),                                       # ragged last tile
        in_specs=[
            pl.BlockSpec((TB, S, H), lambda i: (i, 0, 0)),       # batch-tiled input
            pl.BlockSpec((1, H), lambda i: (0, 0)),              # gw row (resident)
            pl.BlockSpec(memory_space=pltpu.MemorySpace.SMEM),   # fused scalar bias
        ],
        out_specs=pl.BlockSpec((TB, 1), lambda i: (i, 0)),
        compiler_params=pltpu.CompilerParams(
            dimension_semantics=("parallel",),
            vmem_limit_bytes=vmem_limit,
        ),
        cost_estimate=cost,
    )(q_last, gw, bw)

    return out[:, 0]  # .squeeze(1)


def _reference(q_last, gamma, beta, w, b):
    pooled = jnp.mean(q_last.astype(jnp.float32), axis=1)
    mu = jnp.mean(pooled, axis=-1, keepdims=True)
    var = jnp.mean((pooled - mu) ** 2, axis=-1, keepdims=True)
    normed = (pooled - mu) / jnp.sqrt(var + LN_EPS) * gamma + beta
    return (normed @ w.reshape(-1, 1) + b)[:, 0]


if __name__ == "__main__":
    # Small, deterministic shapes: batch=2, query tokens=8, qformer hidden=32
    B, S, H = 2, 8, 32
    key = jax.random.PRNGKey(0)
    k_x, k_w, k_b, k_x2 = jax.random.split(key, 4)

    # Synthetic Q-Former last hidden states (stand-in for the frozen backbone).
    # bf16 straight from the backbone: halves HBM bytes read by this
    # memory-bound head; the kernel accumulates the S-mean in f32.
    q_last = jax.random.normal(k_x, (B, S, H), dtype=jnp.float32).astype(jnp.bfloat16)

    # Deterministic head parameters (LayerNorm defaults: ones/zeros; Linear:
    # small random weights as in nn.Linear init).
    gamma = jnp.ones((H,), dtype=jnp.float32)
    beta = jnp.zeros((H,), dtype=jnp.float32)
    w = jax.random.normal(k_w, (H,), dtype=jnp.float32) * (1.0 / jnp.sqrt(H))
    b = jax.random.normal(k_b, (1,), dtype=jnp.float32) * 0.01

    out = jax.block_until_ready(blip2_regressor_head(q_last, gamma, beta, w, b))
    ref = _reference(q_last, gamma, beta, w, b)
    assert out.shape == (B,)
    assert jnp.allclose(out, ref, atol=2e-4, rtol=2e-4), (out, ref)

    # Exercise the ragged multi-tile path (B not a multiple of the tile).
    B2 = 20
    q2 = jax.random.normal(k_x2, (B2, S, H), dtype=jnp.float32).astype(jnp.bfloat16)
    out2 = jax.block_until_ready(
        blip2_regressor_head(q2, gamma, beta, w, b, block_b=8))
    ref2 = _reference(q2, gamma, beta, w, b)
    assert out2.shape == (B2,)
    assert jnp.allclose(out2, ref2, atol=2e-4, rtol=2e-4), (out2, ref2)

    print("KERNEL_OK")
</pallas_src>

<mosaic_0001>
module attributes {stable_mosaic.version = 11 : i64} {
  func.func @_head_kernel(%arg0: i32, %arg1: memref<2x8x32xbf16, #tpu.memory_space<vmem>>, %arg2: memref<1x32xf32, #tpu.memory_space<vmem>>, %arg3: memref<1x1xf32, #tpu.memory_space<smem>>, %arg4: memref<2x1xf32, #tpu.memory_space<vmem>>) attributes {dimension_semantics = [#tpu.dimension_semantics<parallel>], iteration_bounds = array<i64: 1>, scalar_prefetch = 0 : i64, scratch_operands = 0 : i64, tpu.core_type = #tpu.core_type<tc>, window_params = [{transform_indices = @transform_0, window_bounds = array<i64: 2, 8, 32>}, {pipeline_mode = #tpu.pipeline_mode<synchronous>, transform_indices = @transform_1, window_bounds = array<i64: 1, 32>}, {transform_indices = @transform_2, window_bounds = array<i64: 1, 1>}, {transform_indices = @transform_3, window_bounds = array<i64: 2, 1>}]} {
    %c0 = arith.constant 0 : index
    %c0_0 = arith.constant 0 : index
    %c0_1 = arith.constant 0 : index
    %0 = vector.load %arg1[%c0, %c0_0, %c0_1] : memref<2x8x32xbf16, #tpu.memory_space<vmem>>, vector<2x8x32xbf16>
    %1 = arith.extf %0 : vector<2x8x32xbf16> to vector<2x8x32xf32>
    %cst = arith.constant dense<0.000000e+00> : vector<2x32xf32>
    %2 = vector.multi_reduction <add>, %1, %cst [1] : vector<2x8x32xf32> to vector<2x32xf32>
    %cst_2 = arith.constant 8.000000e+00 : f32
    %3 = vector.broadcast %cst_2 : f32 to vector<2x32xf32>
    %4 = arith.divf %2, %3 : vector<2x32xf32>
    %cst_3 = arith.constant dense<0.000000e+00> : vector<2xf32>
    %5 = vector.multi_reduction <add>, %4, %cst_3 [1] : vector<2x32xf32> to vector<2xf32>
    %6 = vector.shape_cast %5 : vector<2xf32> to vector<2x1xf32>
    %cst_4 = arith.constant 3.200000e+01 : f32
    %7 = vector.broadcast %cst_4 : f32 to vector<2x1xf32>
    %8 = arith.divf %6, %7 : vector<2x1xf32>
    %9 = vector.broadcast %8 : vector<2x1xf32> to vector<2x32xf32>
    %10 = arith.subf %4, %9 : vector<2x32xf32>
    %11 = arith.mulf %10, %10 : vector<2x32xf32>
    %cst_5 = arith.constant dense<0.000000e+00> : vector<2xf32>
    %12 = vector.multi_reduction <add>, %11, %cst_5 [1] : vector<2x32xf32> to vector<2xf32>
    %13 = vector.shape_cast %12 : vector<2xf32> to vector<2x1xf32>
    %cst_6 = arith.constant 3.200000e+01 : f32
    %14 = vector.broadcast %cst_6 : f32 to vector<2x1xf32>
    %15 = arith.divf %13, %14 : vector<2x1xf32>
    %cst_7 = arith.constant 9.99999974E-6 : f32
    %16 = vector.broadcast %cst_7 : f32 to vector<2x1xf32>
    %17 = arith.addf %15, %16 : vector<2x1xf32>
    %18 = math.rsqrt %17 : vector<2x1xf32>
    %c0_8 = arith.constant 0 : index
    %c0_9 = arith.constant 0 : index
    %19 = vector.load %arg2[%c0_8, %c0_9] : memref<1x32xf32, #tpu.memory_space<vmem>>, vector<1x32xf32>
    %20 = vector.broadcast %19 : vector<1x32xf32> to vector<2x32xf32>
    %21 = arith.mulf %10, %20 : vector<2x32xf32>
    %cst_10 = arith.constant dense<0.000000e+00> : vector<2xf32>
    %22 = vector.multi_reduction <add>, %21, %cst_10 [1] : vector<2x32xf32> to vector<2xf32>
    %23 = vector.shape_cast %22 : vector<2xf32> to vector<2x1xf32>
    %24 = arith.mulf %18, %23 : vector<2x1xf32>
    %c0_11 = arith.constant 0 : index
    %c0_12 = arith.constant 0 : index
    %25 = memref.load %arg3[%c0_11, %c0_12] : memref<1x1xf32, #tpu.memory_space<smem>>
    %26 = vector.broadcast %25 : f32 to vector<2x1xf32>
    %27 = arith.addf %24, %26 : vector<2x1xf32>
    %c0_13 = arith.constant 0 : index
    %c0_14 = arith.constant 0 : index
    %28 = vector.load %arg4[%c0_13, %c0_14] : memref<2x1xf32, #tpu.memory_space<vmem>>, vector<2x1xf32>
    tpu.vector_store %arg4[%c0_13, %c0_14], %27 {strides = array<i32>} : memref<2x1xf32, #tpu.memory_space<vmem>>, vector<2x1xf32>,
    return
  }
  func.func @transform_0(%arg0: i32) -> (i32, i32, i32) {
    %c0_i32 = arith.constant 0 : i32
    %c0_i32_0 = arith.constant 0 : i32
    %c0_i32_1 = arith.constant 0 : i32
    return %arg0, %c0_i32, %c0_i32_0 : i32, i32, i32
  }
  func.func @transform_1(%arg0: i32) -> (i32, i32) {
    %c0_i32 = arith.constant 0 : i32
    %c0_i32_0 = arith.constant 0 : i32
    %c0_i32_1 = arith.constant 0 : i32
    return %c0_i32, %c0_i32_0 : i32, i32
  }
  func.func @transform_2(%arg0: i32) -> (i32, i32) {
    %c0_i32 = arith.constant 0 : i32
    %c0_i32_0 = arith.constant 0 : i32
    %c0_i32_1 = arith.constant 0 : i32
    return %c0_i32, %c0_i32_0 : i32, i32
  }
  func.func @transform_3(%arg0: i32) -> (i32, i32) {
    %c0_i32 = arith.constant 0 : i32
    %c0_i32_0 = arith.constant 0 : i32
    return %arg0, %c0_i32 : i32, i32
  }
}

</mosaic_0001>

<llo_original>
// kernel: tpu_custom_call.1
$region0: #{tpu_custom_call.1}
  #allocation0 [shape = 'u32[]', space=smem, size = 0x4, offset = 0x4, fixed_abs, tag = 'smem constant byte address 0x4 - core index']
  #allocation1 [shape = 'u32[144,128]{1,0:T(1,128)}', space=vmem, size = 0x12000, scoped, tag = 'internal scratch']
  #allocation2 [shape = 'f32[1,1]{1,0:T(1,128)S(6)}', space=smem, size = 0x200, scoped, tag = 'scoped memory for tpu_custom_call.1']
  %s0 = inlined_call_operand.hbm [shape: bf16[2,8,32], index: 0, kind: input, shape index: {}]
  %s1 = inlined_call_operand.vmem [shape: f32[1,32], index: 1, kind: input, shape index: {}]
  %s2 = inlined_call_operand.<no memory space> [shape: f32[1,1], index: 2, kind: input, shape index: {}]
  %s3 = inlined_call_operand.vmem [shape: f32[2,1], index: 3, kind: output, shape index: {}]
  %s4 = sld [smem:[#allocation0]]
  $region26: #{tpu_custom_call.1} parent=0
    _
  %s6 = ssub.s32 1, %s4
  %s7 = scalar_select 0, %s6, %s4
  %8 = sst [smem:[#allocation2]] %s2
  $region1: #{tpu_custom_call.1} parent=0
    #allocation3 [shape = 'u8[4096]{0}', space=vmem, size = 0x1000, scoped, tag = 'input window, operand 0, single buffered']
    #allocation4 [shape = 's32[1]{0}', space=sflag, size = 0x4, scoped, tag = 'scoped memory for tpu_custom_call.1']
    %9 = vsyncpa [#allocation4], 0
    // Predicated region
    $region2: #{tpu_custom_call.1} parent=1 // pred_check
      _
    $region3: #{tpu_custom_call.1} parent=1 // pred_check_branch
      %11 = sbr.rel (0) target = $region5
    $region4: #{tpu_custom_call.1} parent=1 // pred_region
      %s13 = ssub.s32 128, 128
      %14 = vsyncadd [#allocation4], %s13
      %s15 = sshll.u32 [#allocation3], 4
      %s16 = int_to_ptr.vmem [resolvable:$true] %s15
      %21 = dma.hbm_to_vmem [thread:$0]  %s0, 128, %s16, [#allocation4], 64, 64, 4
    $region5: #{tpu_custom_call.1} parent=1 // pred_fallthru
      _
    // Predicated region
    $region6: #{tpu_custom_call.1} parent=1 // pred_check
      _
    $region7: #{tpu_custom_call.1} parent=1 // pred_check_branch
      %23 = sbr.rel (0) target = $region9
    $region8: #{tpu_custom_call.1} parent=1 // pred_region
      _
    $region9: #{tpu_custom_call.1} parent=1 // pred_fallthru
      _
    // Predicated region
    $region10: #{tpu_custom_call.1} parent=1 // pred_check
      _
    $region11: #{tpu_custom_call.1} parent=1 // pred_check_branch
      %25 = sbr.rel (0) target = $region13
    $region12: #{tpu_custom_call.1} parent=1 // pred_region
      _
    $region13: #{tpu_custom_call.1} parent=1 // pred_fallthru
      _
    // Predicated region
    $region14: #{tpu_custom_call.1} parent=1 // pred_check
      _
    $region15: #{tpu_custom_call.1} parent=1 // pred_check_branch
      %27 = sbr.rel (0) target = $region17
    $region16: #{tpu_custom_call.1} parent=1 // pred_region
      %28 = dma.done [#allocation4], 128
    $region17: #{tpu_custom_call.1} parent=1 // pred_fallthru
      _
    %v29 = vld [vmem:[#allocation3] sm:$0xf]
    %v30 = vld [vmem:[#allocation3 + $0x4] sm:$0xf]
    %v31 = vunpack.c.l.bf16 %v29
    %v32 = vunpack.c.l.bf16 %v30
    %vm33 = vcmask 261120
    %v34 = vsel %vm33, %v31, 0.0
    %v35 = vrot.slane %v34, 4
    %v36 = vadd.f32 %v34, %v35
    %v37 = vrot.slane %v36, 2
    %v38 = vadd.f32 %v36, %v37
    %v39 = vrot.slane %v38, 1
    %v40 = vadd.f32 %v38, %v39
    %v41 = vsel %vm33, %v32, 0.0
    %v42 = vrot.slane %v41, 4
    %v43 = vadd.f32 %v41, %v42
    %v44 = vrot.slane %v43, 2
    %v45 = vadd.f32 %v43, %v44
    %v46 = vrot.slane %v45, 1
    %v47 = vadd.f32 %v45, %v46
    %v48 = vrcp.pop 8.0
    %v49 = vmul.f32 %v40, %v48
    %v50 = vmul.f32 %v47, %v48
    %vm53 = vcmask 1041409
    %v54 = vsel %vm53, %v50, %v49
    %vm56 = vcmask 254976
    %v57 = vsel %vm56, %v54, 0.0
    %58 = vadd.xlane.f32.xlu0 %v57
    %v59 = vpop.xlane.xlu0 %58
    %v60 = vrcp.pop 32.0
    %v61 = vmul.f32 %v59, %v60
    %v63 = vrot.slane %v61, 1
    %v66 = vsub.f32 %v49, %v61
    %v67 = vsub.f32 %v50, %v63
    %v68 = vmul.f32 %v66, %v66
    %v69 = vmul.f32 %v67, %v67
    %v72 = vrot.slane %v69, 7
    %v73 = vsel %vm53, %v72, %v68
    %v75 = vsel %vm56, %v73, 0.0
    %76 = vadd.xlane.f32.xlu0 %v75
    %v77 = vpop.xlane.xlu0 %76
    %v78 = vmul.f32 %v77, %v60
    %v79 = vadd.f32 %v78, 1e-05
    %v80 = vrsqrt.pop %v79
    %v81 = vld [vmem:[%s1] sm:$0x1]
    %v83 = vlaneseq
    %v84 = vshrl.u32 %v83, 7
    %v85 = vsub.s32 0, %v84
    %v86 = vrot.slane %v81, %v85
    %v88 = vmul.f32 %v66, %v86
    %v89 = vmul.f32 %v67, %v86
    %v92 = vrot.slane %v89, 7
    %v93 = vsel %vm53, %v92, %v88
    %v95 = vsel %vm56, %v93, 0.0
    %96 = vadd.xlane.f32.xlu0 %v95
    %v97 = vpop.xlane.xlu0 %96
    %v98 = vmul.f32 %v80, %v97
    %s99 = sld [smem:[#allocation2]]
    %v100 = vstv %s99
    %v101 = vadd.f32 %v98, %v100
    %vm102 = vcmask 1024
    %103 = vst.msk [vmem:[%s3] sm:$0x3] %vm102, %v101
    // Predicated region
    $region18: #{tpu_custom_call.1} parent=1 // pred_check
      _
    $region19: #{tpu_custom_call.1} parent=1 // pred_check_branch
      %105 = sbr.rel (0) target = $region21
    $region20: #{tpu_custom_call.1} parent=1 // pred_region
      _
    $region21: #{tpu_custom_call.1} parent=1 // pred_fallthru
      _
    // Predicated region
    $region22: #{tpu_custom_call.1} parent=1 // pred_check
      _
    $region23: #{tpu_custom_call.1} parent=1 // pred_check_branch
      %107 = sbr.rel (0) target = $region25
    $region24: #{tpu_custom_call.1} parent=1 // pred_region
      _
    $region25: #{tpu_custom_call.1} parent=1 // pred_fallthru
      _
    %108 = vsyncpa [#allocation4], 1

</llo_original>
